<compile_context>
chip_gen: v5e
topology: v5e:2x2
jax: 0.10.0
libtpu: 0.0.40
codegen_flags: <defaults>
</compile_context>

<pallas_src>
import jax
import jax.numpy as jnp
from jax.experimental import pallas as pl
from jax.experimental.pallas import tpu as pltpu


# Batch rows per grid step: multiple of 128 (lane width / v5e MXU) and equal to
# the v6e/v7x 256x256 MXU dimension. Per-step VMEM (x tile + out tile + all
# weights, double-buffered) is only a few hundred KiB -- far under even v7x's
# 32 MiB scoped default, so no vmem_limit_bytes override is needed.
_TILE_B = 256
# Below this batch size, let XLA fuse the whole MLP instead of launching Pallas.
_PALLAS_MIN_BATCH = 128


def _mlp_kernel(xT_ref,
                w1_ref, b1_ref,
                w2_ref, b2_ref,
                w3_ref, b3_ref,
                w4_ref, b4_ref,
                o_ref):
    # xT_ref: [in_d, TILE_B] bf16 (batch on lanes)
    # w*_ref: [out_f, in_f]  bf16 (PyTorch storage) ; b*_ref: [out_f, 1] f32
    # Computes y^T = W4 @ relu(W3 @ relu(W2 @ relu(W1 @ x^T + b1) + b2) + b3) + b4
    cdt = xT_ref.dtype  # bf16 operands for the MXU; accumulation stays f32.

    h = jnp.dot(w1_ref[...], xT_ref[...], preferred_element_type=jnp.float32)
    h = jnp.maximum(h + b1_ref[...], 0.0)

    h = jnp.dot(w2_ref[...], h.astype(cdt), preferred_element_type=jnp.float32)
    h = jnp.maximum(h + b2_ref[...], 0.0)

    h = jnp.dot(w3_ref[...], h.astype(cdt), preferred_element_type=jnp.float32)
    h = jnp.maximum(h + b3_ref[...], 0.0)

    h = jnp.dot(w4_ref[...], h.astype(cdt), preferred_element_type=jnp.float32)
    h = h + b4_ref[...]

    o_ref[...] = h.astype(o_ref.dtype)  # [out_d, TILE_B] lane-dense store


def _mlp_xla(x, params):
    """Fused XLA path, also used as the f32 reference."""
    h = x
    for name in ("l1", "l2", "l3"):
        w, b = params[name]
        h = jnp.maximum(h @ w.T + b.T, 0.0)
    w, b = params["l4"]
    return h @ w.T + b.T


@jax.jit
def mlp_forward(x, params):
    """x: [B, input_d] f32; params: name -> (w [out_f, in_f] f32, b [out_f, 1] f32)."""
    w1, b1 = params["l1"]
    w2, b2 = params["l2"]
    w3, b3 = params["l3"]
    w4, b4 = params["l4"]

    batch, in_d = x.shape
    out_d = w4.shape[0]

    if batch < _PALLAS_MIN_BATCH:
        # Too small to amortize kernel/grid overhead; XLA fusion wins here.
        return _mlp_xla(x, params)

    n_tiles = pl.cdiv(batch, _TILE_B)
    b_pad = n_tiles * _TILE_B

    # Lane-dense bf16 activation slab: [in_d, B_pad], batch on the lane axis.
    xT = x.astype(jnp.bfloat16).T
    if b_pad != batch:
        xT = jnp.pad(xT, ((0, 0), (0, b_pad - batch)))

    args = (
        xT,
        w1.astype(jnp.bfloat16), b1,
        w2.astype(jnp.bfloat16), b2,
        w3.astype(jnp.bfloat16), b3,
        w4.astype(jnp.bfloat16), b4,
    )

    const_map = lambda i: (0, 0)  # weights/biases: same (whole-array) block every step
    in_specs = [pl.BlockSpec((in_d, _TILE_B), lambda i: (0, i))]
    in_specs += [pl.BlockSpec(a.shape, const_map) for a in args[1:]]

    outT = pl.pallas_call(
        _mlp_kernel,
        out_shape=jax.ShapeDtypeStruct((out_d, b_pad), jnp.float32),
        grid=(n_tiles,),
        in_specs=in_specs,
        out_specs=pl.BlockSpec((out_d, _TILE_B), lambda i: (0, i)),
        compiler_params=pltpu.CompilerParams(
            dimension_semantics=("parallel",),
        ),
    )(*args)

    # Back to the PyTorch [B, out_d] convention; drop the batch padding.
    return outT[:, :batch].T.astype(x.dtype)


def init_params(key, input_d, output_d):
    """PyTorch-style nn.Linear init: U(-1/sqrt(fan_in), 1/sqrt(fan_in)).
    Weights kept in PyTorch [out_f, in_f] storage; biases as [out_f, 1]."""
    dims = [(input_d, 8), (8, 16), (16, 32), (32, output_d)]
    params = {}
    for i, (fan_in, fan_out) in enumerate(dims, start=1):
        key, kw, kb = jax.random.split(key, 3)
        bound = 1.0 / float(fan_in) ** 0.5
        w = jax.random.uniform(kw, (fan_out, fan_in), jnp.float32, -bound, bound)
        b = jax.random.uniform(kb, (fan_out, 1), jnp.float32, -bound, bound)
        params[f"l{i}"] = (w, b)
    return params


def mlp_reference(x, params):
    return _mlp_xla(x, params)


if __name__ == "__main__":
    input_d, output_d = 16, 4
    batch = 1000  # not a multiple of TILE_B -> exercises the padded last tile + 4-step grid

    key = jax.random.PRNGKey(0)
    key, kx = jax.random.split(key)
    x = jax.random.normal(kx, (batch, input_d), jnp.float32)
    params = init_params(key, input_d, output_d)

    out = jax.block_until_ready(mlp_forward(x, params))
    ref = mlp_reference(x, params)
    assert out.shape == (batch, output_d), out.shape
    # bf16 matmul operands with f32 accumulation -> loose tolerance vs f32 reference.
    assert jnp.allclose(out, ref, atol=5e-2, rtol=5e-2), "mismatch vs reference"

    # Tiny-batch path (bypasses Pallas, pure fused XLA) should match tightly.
    x_small = jax.random.normal(kx, (8, input_d), jnp.float32)
    out_small = jax.block_until_ready(mlp_forward(x_small, params))
    ref_small = mlp_reference(x_small, params)
    assert out_small.shape == (8, output_d)
    assert jnp.allclose(out_small, ref_small, atol=1e-5, rtol=1e-5), "mismatch (small batch)"

    print("KERNEL_OK")
</pallas_src>

<mosaic_0001>
module attributes {stable_mosaic.version = 11 : i64} {
  func.func @_mlp_kernel(%arg0: i32, %arg1: memref<16x256xbf16, #tpu.memory_space<vmem>>, %arg2: memref<8x16xbf16, #tpu.memory_space<vmem>>, %arg3: memref<8x1xf32, #tpu.memory_space<vmem>>, %arg4: memref<16x8xbf16, #tpu.memory_space<vmem>>, %arg5: memref<16x1xf32, #tpu.memory_space<vmem>>, %arg6: memref<32x16xbf16, #tpu.memory_space<vmem>>, %arg7: memref<32x1xf32, #tpu.memory_space<vmem>>, %arg8: memref<4x32xbf16, #tpu.memory_space<vmem>>, %arg9: memref<4x1xf32, #tpu.memory_space<vmem>>, %arg10: memref<4x256xf32, #tpu.memory_space<vmem>>) attributes {dimension_semantics = [#tpu.dimension_semantics<parallel>], iteration_bounds = array<i64: 4>, scalar_prefetch = 0 : i64, scratch_operands = 0 : i64, tpu.core_type = #tpu.core_type<tc>, window_params = [{transform_indices = @transform_0, window_bounds = array<i64: 16, 256>}, {pipeline_mode = #tpu.pipeline_mode<synchronous>, transform_indices = @transform_1, window_bounds = array<i64: 8, 16>}, {pipeline_mode = #tpu.pipeline_mode<synchronous>, transform_indices = @transform_2, window_bounds = array<i64: 8, 1>}, {pipeline_mode = #tpu.pipeline_mode<synchronous>, transform_indices = @transform_3, window_bounds = array<i64: 16, 8>}, {pipeline_mode = #tpu.pipeline_mode<synchronous>, transform_indices = @transform_4, window_bounds = array<i64: 16, 1>}, {pipeline_mode = #tpu.pipeline_mode<synchronous>, transform_indices = @transform_5, window_bounds = array<i64: 32, 16>}, {pipeline_mode = #tpu.pipeline_mode<synchronous>, transform_indices = @transform_6, window_bounds = array<i64: 32, 1>}, {pipeline_mode = #tpu.pipeline_mode<synchronous>, transform_indices = @transform_7, window_bounds = array<i64: 4, 32>}, {pipeline_mode = #tpu.pipeline_mode<synchronous>, transform_indices = @transform_8, window_bounds = array<i64: 4, 1>}, {transform_indices = @transform_9, window_bounds = array<i64: 4, 256>}]} {
    %c0 = arith.constant 0 : index
    %c0_0 = arith.constant 0 : index
    %0 = vector.load %arg2[%c0, %c0_0] : memref<8x16xbf16, #tpu.memory_space<vmem>>, vector<8x16xbf16>
    %c0_1 = arith.constant 0 : index
    %c0_2 = arith.constant 0 : index
    %1 = vector.load %arg1[%c0_1, %c0_2] : memref<16x256xbf16, #tpu.memory_space<vmem>>, vector<16x256xbf16>
    %cst = arith.constant dense<0.000000e+00> : vector<8x256xf32>
    %2 = tpu.matmul %0, %1, %cst {dimension_numbers = #tpu.dot_dimension_numbers<[1], [0], [0], [1], [0, 0, 1, 1], [], []>} : vector<8x16xbf16>, vector<16x256xbf16>, vector<8x256xf32> -> vector<8x256xf32>
    %c0_3 = arith.constant 0 : index
    %c0_4 = arith.constant 0 : index
    %3 = vector.load %arg3[%c0_3, %c0_4] : memref<8x1xf32, #tpu.memory_space<vmem>>, vector<8x1xf32>
    %4 = vector.broadcast %3 : vector<8x1xf32> to vector<8x256xf32>
    %5 = arith.addf %2, %4 : vector<8x256xf32>
    %cst_5 = arith.constant 0.000000e+00 : f32
    %6 = vector.broadcast %cst_5 : f32 to vector<8x256xf32>
    %7 = arith.maximumf %5, %6 : vector<8x256xf32>
    %c0_6 = arith.constant 0 : index
    %c0_7 = arith.constant 0 : index
    %8 = vector.load %arg4[%c0_6, %c0_7] : memref<16x8xbf16, #tpu.memory_space<vmem>>, vector<16x8xbf16>
    %9 = arith.truncf %7 : vector<8x256xf32> to vector<8x256xbf16>
    %cst_8 = arith.constant dense<0.000000e+00> : vector<16x256xf32>
    %10 = tpu.matmul %8, %9, %cst_8 {dimension_numbers = #tpu.dot_dimension_numbers<[1], [0], [0], [1], [0, 0, 1, 1], [], []>} : vector<16x8xbf16>, vector<8x256xbf16>, vector<16x256xf32> -> vector<16x256xf32>
    %c0_9 = arith.constant 0 : index
    %c0_10 = arith.constant 0 : index
    %11 = vector.load %arg5[%c0_9, %c0_10] : memref<16x1xf32, #tpu.memory_space<vmem>>, vector<16x1xf32>
    %12 = vector.broadcast %11 : vector<16x1xf32> to vector<16x256xf32>
    %13 = arith.addf %10, %12 : vector<16x256xf32>
    %cst_11 = arith.constant 0.000000e+00 : f32
    %14 = vector.broadcast %cst_11 : f32 to vector<16x256xf32>
    %15 = arith.maximumf %13, %14 : vector<16x256xf32>
    %c0_12 = arith.constant 0 : index
    %c0_13 = arith.constant 0 : index
    %16 = vector.load %arg6[%c0_12, %c0_13] : memref<32x16xbf16, #tpu.memory_space<vmem>>, vector<32x16xbf16>
    %17 = arith.truncf %15 : vector<16x256xf32> to vector<16x256xbf16>
    %cst_14 = arith.constant dense<0.000000e+00> : vector<32x256xf32>
    %18 = tpu.matmul %16, %17, %cst_14 {dimension_numbers = #tpu.dot_dimension_numbers<[1], [0], [0], [1], [0, 0, 1, 1], [], []>} : vector<32x16xbf16>, vector<16x256xbf16>, vector<32x256xf32> -> vector<32x256xf32>
    %c0_15 = arith.constant 0 : index
    %c0_16 = arith.constant 0 : index
    %19 = vector.load %arg7[%c0_15, %c0_16] : memref<32x1xf32, #tpu.memory_space<vmem>>, vector<32x1xf32>
    %20 = vector.broadcast %19 : vector<32x1xf32> to vector<32x256xf32>
    %21 = arith.addf %18, %20 : vector<32x256xf32>
    %cst_17 = arith.constant 0.000000e+00 : f32
    %22 = vector.broadcast %cst_17 : f32 to vector<32x256xf32>
    %23 = arith.maximumf %21, %22 : vector<32x256xf32>
    %c0_18 = arith.constant 0 : index
    %c0_19 = arith.constant 0 : index
    %24 = vector.load %arg8[%c0_18, %c0_19] : memref<4x32xbf16, #tpu.memory_space<vmem>>, vector<4x32xbf16>
    %25 = arith.truncf %23 : vector<32x256xf32> to vector<32x256xbf16>
    %cst_20 = arith.constant dense<0.000000e+00> : vector<4x256xf32>
    %26 = tpu.matmul %24, %25, %cst_20 {dimension_numbers = #tpu.dot_dimension_numbers<[1], [0], [0], [1], [0, 0, 1, 1], [], []>} : vector<4x32xbf16>, vector<32x256xbf16>, vector<4x256xf32> -> vector<4x256xf32>
    %c0_21 = arith.constant 0 : index
    %c0_22 = arith.constant 0 : index
    %27 = vector.load %arg9[%c0_21, %c0_22] : memref<4x1xf32, #tpu.memory_space<vmem>>, vector<4x1xf32>
    %28 = vector.broadcast %27 : vector<4x1xf32> to vector<4x256xf32>
    %29 = arith.addf %26, %28 : vector<4x256xf32>
    %c0_23 = arith.constant 0 : index
    %c0_24 = arith.constant 0 : index
    %30 = vector.load %arg10[%c0_23, %c0_24] : memref<4x256xf32, #tpu.memory_space<vmem>>, vector<4x256xf32>
    tpu.vector_store %arg10[%c0_23, %c0_24], %29 {strides = array<i32>} : memref<4x256xf32, #tpu.memory_space<vmem>>, vector<4x256xf32>,
    return
  }
  func.func @transform_0(%arg0: i32) -> (i32, i32) {
    %c0_i32 = arith.constant 0 : i32
    %c0_i32_0 = arith.constant 0 : i32
    return %c0_i32, %arg0 : i32, i32
  }
  func.func @transform_1(%arg0: i32) -> (i32, i32) {
    %c0_i32 = arith.constant 0 : i32
    %c0_i32_0 = arith.constant 0 : i32
    %c0_i32_1 = arith.constant 0 : i32
    return %c0_i32, %c0_i32_0 : i32, i32
  }
  func.func @transform_2(%arg0: i32) -> (i32, i32) {
    %c0_i32 = arith.constant 0 : i32
    %c0_i32_0 = arith.constant 0 : i32
    %c0_i32_1 = arith.constant 0 : i32
    return %c0_i32, %c0_i32_0 : i32, i32
  }
  func.func @transform_3(%arg0: i32) -> (i32, i32) {
    %c0_i32 = arith.constant 0 : i32
    %c0_i32_0 = arith.constant 0 : i32
    %c0_i32_1 = arith.constant 0 : i32
    return %c0_i32, %c0_i32_0 : i32, i32
  }
  func.func @transform_4(%arg0: i32) -> (i32, i32) {
    %c0_i32 = arith.constant 0 : i32
    %c0_i32_0 = arith.constant 0 : i32
    %c0_i32_1 = arith.constant 0 : i32
    return %c0_i32, %c0_i32_0 : i32, i32
  }
  func.func @transform_5(%arg0: i32) -> (i32, i32) {
    %c0_i32 = arith.constant 0 : i32
    %c0_i32_0 = arith.constant 0 : i32
    %c0_i32_1 = arith.constant 0 : i32
    return %c0_i32, %c0_i32_0 : i32, i32
  }
  func.func @transform_6(%arg0: i32) -> (i32, i32) {
    %c0_i32 = arith.constant 0 : i32
    %c0_i32_0 = arith.constant 0 : i32
    %c0_i32_1 = arith.constant 0 : i32
    return %c0_i32, %c0_i32_0 : i32, i32
  }
  func.func @transform_7(%arg0: i32) -> (i32, i32) {
    %c0_i32 = arith.constant 0 : i32
    %c0_i32_0 = arith.constant 0 : i32
    %c0_i32_1 = arith.constant 0 : i32
    return %c0_i32, %c0_i32_0 : i32, i32
  }
  func.func @transform_8(%arg0: i32) -> (i32, i32) {
    %c0_i32 = arith.constant 0 : i32
    %c0_i32_0 = arith.constant 0 : i32
    %c0_i32_1 = arith.constant 0 : i32
    return %c0_i32, %c0_i32_0 : i32, i32
  }
  func.func @transform_9(%arg0: i32) -> (i32, i32) {
    %c0_i32 = arith.constant 0 : i32
    %c0_i32_0 = arith.constant 0 : i32
    return %c0_i32, %arg0 : i32, i32
  }
}

</mosaic_0001>

<llo_original>
// kernel: mlp_forward.1
$region0: #{mlp_forward.1}
  #allocation0 [shape = 'u32[]', space=smem, size = 0x4, offset = 0x4, fixed_abs, tag = 'smem constant byte address 0x4 - core index']
  #allocation1 [shape = 'u32[72,128]{1,0:T(1,128)}', space=vmem, size = 0x9000, scoped, tag = 'internal scratch']
  %s0 = inlined_call_operand.vmem [shape: bf16[16,1024], index: 0, kind: input, shape index: {}]
  %s1 = inlined_call_operand.vmem [shape: bf16[8,16], index: 1, kind: input, shape index: {}]
  %s2 = inlined_call_operand.vmem [shape: f32[8,1], index: 2, kind: input, shape index: {}]
  %s3 = inlined_call_operand.vmem [shape: bf16[16,8], index: 3, kind: input, shape index: {}]
  %s4 = inlined_call_operand.vmem [shape: f32[16,1], index: 4, kind: input, shape index: {}]
  %s5 = inlined_call_operand.vmem [shape: bf16[32,16], index: 5, kind: input, shape index: {}]
  %s6 = inlined_call_operand.vmem [shape: f32[32,1], index: 6, kind: input, shape index: {}]
  %s7 = inlined_call_operand.vmem [shape: bf16[4,32], index: 7, kind: input, shape index: {}]
  %s8 = inlined_call_operand.vmem [shape: f32[4,1], index: 8, kind: input, shape index: {}]
  %s9 = inlined_call_operand.vmem [shape: f32[4,1024], index: 9, kind: output, shape index: {}]
  %s10 = sld [smem:[#allocation0]]
  $region107: #{mlp_forward.1} parent=0
    _
  %s12 = ssub.s32 1, %s10
  %s13 = scalar_select 0, %s12, %s10
  $region1: #{mlp_forward.1} parent=0
    #allocation2 [shape = 'u8[16384]{0}', space=vmem, size = 0x4000, scoped, tag = 'input window, operand 0']
    loop: start=0, step=1, limit=6
    $region2: #{mlp_forward.1} parent=1 // loop_pre_header
      _
    $region3: #{mlp_forward.1} parent=1 // loop_header
      %s15 = sphi 0, %s19
      %p16 = scmp.ge.s32.totalorder %s15, 6
      %s25 = sphi 0, %s27
      %s28 = sphi 0, %s25
      %s29 = sphi 0, %s28
      %s45 = sphi 0, %s29
      %s49 = sphi 0, %s49
      %s51 = sphi 0, %s49
      %s52 = sphi 0, %s51
      %s66 = sphi 0, %s52
      %s70 = sphi 0, %s70
      %s72 = sphi 0, %s70
      %s73 = sphi 0, %s72
      %s87 = sphi 0, %s73
      %s91 = sphi 0, %s91
      %s93 = sphi 0, %s91
      %s94 = sphi 0, %s93
      %s108 = sphi 0, %s94
      %s112 = sphi 0, %s112
      %s114 = sphi 0, %s112
      %s115 = sphi 0, %s114
      %s129 = sphi 0, %s115
      %s133 = sphi 0, %s133
      %s135 = sphi 0, %s133
      %s136 = sphi 0, %s135
      %s150 = sphi 0, %s136
      %s154 = sphi 0, %s154
      %s156 = sphi 0, %s154
      %s157 = sphi 0, %s156
      %s171 = sphi 0, %s157
      %s175 = sphi 0, %s175
      %s177 = sphi 0, %s175
      %s178 = sphi 0, %s177
      %s192 = sphi 0, %s178
      %s196 = sphi 0, %s196
      %s198 = sphi 0, %s196
      %s199 = sphi 0, %s198
      %s213 = sphi 0, %s199
      %s219 = sphi 0, %s221
      %s222 = sphi 0, %s219
      %s223 = sphi 0, %s222
      %s239 = sphi 0, %s223
    $region4: #{mlp_forward.1} parent=1 // loop_header_branch
      %18 = sbr.rel (%p16) target = $region8
    $region5: #{mlp_forward.1} parent=1 // loop_body
      %s20 = ssub.s32 %s15, 1
      %s21 = ssub.s32 %s15, 2
      %s22 = sadd.s32 %s15, 1
      %s23 = ssub.s32 %s15, %s22
      %p24 = scmp.eq.s32.totalorder %s23, 0
      %s26 = sadd.s32 %s25, 1
      %s27 = scalar_select %p24, %s25, %s26
      %p30 = pneg %p24
      %p31 = scmp.eq.s32.totalorder %s15, 3
      %p32 = por %p30, %p31
      %p33 = scmp.ne.s32.totalorder %s25, %s28
      %p34 = scmp.eq.s32.totalorder %s15, 0
      %p35 = por %p33, %p34
      %p36 = scmp.ne.s32.totalorder %s25, %s28
      %p37 = scmp.eq.s32.totalorder %s20, 3
      %p38 = por %p36, %p37
      %p39 = scmp.ne.s32.totalorder %s28, %s29
      %p40 = scmp.eq.s32.totalorder %s20, 0
      %p41 = por %p39, %p40
      %p42 = scmp.ne.s32.totalorder %s28, %s29
      %p43 = scmp.eq.s32.totalorder %s21, 3
      %p44 = por %p42, %p43
      %p46 = scmp.ne.s32.totalorder %s29, %s45
      %p47 = scmp.eq.s32.totalorder %s21, 0
      %p48 = por %p46, %p47
      %s50 = sadd.s32 %s49, 1
      %p53 = scmp.eq.s32.totalorder %s15, 3
      %p54 = scmp.ne.s32.totalorder %s49, %s51
      %p55 = scmp.eq.s32.totalorder %s15, 0
      %p56 = por %p54, %p55
      %p57 = scmp.ne.s32.totalorder %s49, %s51
      %p58 = scmp.eq.s32.totalorder %s20, 3
      %p59 = por %p57, %p58
      %p60 = scmp.ne.s32.totalorder %s51, %s52
      %p61 = scmp.eq.s32.totalorder %s20, 0
      %p62 = por %p60, %p61
      %p63 = scmp.ne.s32.totalorder %s51, %s52
      %p64 = scmp.eq.s32.totalorder %s21, 3
      %p65 = por %p63, %p64
      %p67 = scmp.ne.s32.totalorder %s52, %s66
      %p68 = scmp.eq.s32.totalorder %s21, 0
      %p69 = por %p67, %p68
      %s71 = sadd.s32 %s70, 1
      %p74 = scmp.eq.s32.totalorder %s15, 3
      %p75 = scmp.ne.s32.totalorder %s70, %s72
      %p76 = scmp.eq.s32.totalorder %s15, 0
      %p77 = por %p75, %p76
      %p78 = scmp.ne.s32.totalorder %s70, %s72
      %p79 = scmp.eq.s32.totalorder %s20, 3
      %p80 = por %p78, %p79
      %p81 = scmp.ne.s32.totalorder %s72, %s73
      %p82 = scmp.eq.s32.totalorder %s20, 0
      %p83 = por %p81, %p82
      %p84 = scmp.ne.s32.totalorder %s72, %s73
      %p85 = scmp.eq.s32.totalorder %s21, 3
      %p86 = por %p84, %p85
      %p88 = scmp.ne.s32.totalorder %s73, %s87
      %p89 = scmp.eq.s32.totalorder %s21, 0
      %p90 = por %p88, %p89
      %s92 = sadd.s32 %s91, 1
      %p95 = scmp.eq.s32.totalorder %s15, 3
      %p96 = scmp.ne.s32.totalorder %s91, %s93
      %p97 = scmp.eq.s32.totalorder %s15, 0
      %p98 = por %p96, %p97
      %p99 = scmp.ne.s32.totalorder %s91, %s93
      %p100 = scmp.eq.s32.totalorder %s20, 3
      %p101 = por %p99, %p100
      %p102 = scmp.ne.s32.totalorder %s93, %s94
      %p103 = scmp.eq.s32.totalorder %s20, 0
      %p104 = por %p102, %p103
      %p105 = scmp.ne.s32.totalorder %s93, %s94
      %p106 = scmp.eq.s32.totalorder %s21, 3
      %p107 = por %p105, %p106
      %p109 = scmp.ne.s32.totalorder %s94, %s108
      %p110 = scmp.eq.s32.totalorder %s21, 0
      %p111 = por %p109, %p110
      %s113 = sadd.s32 %s112, 1
      %p116 = scmp.eq.s32.totalorder %s15, 3
      %p117 = scmp.ne.s32.totalorder %s112, %s114
      %p118 = scmp.eq.s32.totalorder %s15, 0
      %p119 = por %p117, %p118
      %p120 = scmp.ne.s32.totalorder %s112, %s114
      %p121 = scmp.eq.s32.totalorder %s20, 3
      %p122 = por %p120, %p121
      %p123 = scmp.ne.s32.totalorder %s114, %s115
      %p124 = scmp.eq.s32.totalorder %s20, 0
      %p125 = por %p123, %p124
      %p126 = scmp.ne.s32.totalorder %s114, %s115
      %p127 = scmp.eq.s32.totalorder %s21, 3
      %p128 = por %p126, %p127
      %p130 = scmp.ne.s32.totalorder %s115, %s129
      %p131 = scmp.eq.s32.totalorder %s21, 0
      %p132 = por %p130, %p131
      %s134 = sadd.s32 %s133, 1
      %p137 = scmp.eq.s32.totalorder %s15, 3
      %p138 = scmp.ne.s32.totalorder %s133, %s135
      %p139 = scmp.eq.s32.totalorder %s15, 0
      %p140 = por %p138, %p139
      %p141 = scmp.ne.s32.totalorder %s133, %s135
      %p142 = scmp.eq.s32.totalorder %s20, 3
      %p143 = por %p141, %p142
      %p144 = scmp.ne.s32.totalorder %s135, %s136
      %p145 = scmp.eq.s32.totalorder %s20, 0
      %p146 = por %p144, %p145
      %p147 = scmp.ne.s32.totalorder %s135, %s136
      %p148 = scmp.eq.s32.totalorder %s21, 3
      %p149 = por %p147, %p148
      %p151 = scmp.ne.s32.totalorder %s136, %s150
      %p152 = scmp.eq.s32.totalorder %s21, 0
      %p153 = por %p151, %p152
      %s155 = sadd.s32 %s154, 1
      %p158 = scmp.eq.s32.totalorder %s15, 3
      %p159 = scmp.ne.s32.totalorder %s154, %s156
      %p160 = scmp.eq.s32.totalorder %s15, 0
      %p161 = por %p159, %p160
      %p162 = scmp.ne.s32.totalorder %s154, %s156
      %p163 = scmp.eq.s32.totalorder %s20, 3
      %p164 = por %p162, %p163
      %p165 = scmp.ne.s32.totalorder %s156, %s157
      %p166 = scmp.eq.s32.totalorder %s20, 0
      %p167 = por %p165, %p166
      %p168 = scmp.ne.s32.totalorder %s156, %s157
      %p169 = scmp.eq.s32.totalorder %s21, 3
      %p170 = por %p168, %p169
      %p172 = scmp.ne.s32.totalorder %s157, %s171
      %p173 = scmp.eq.s32.totalorder %s21, 0
      %p174 = por %p172, %p173
      %s176 = sadd.s32 %s175, 1
      %p179 = scmp.eq.s32.totalorder %s15, 3
      %p180 = scmp.ne.s32.totalorder %s175, %s177
      %p181 = scmp.eq.s32.totalorder %s15, 0
      %p182 = por %p180, %p181
      %p183 = scmp.ne.s32.totalorder %s175, %s177
      %p184 = scmp.eq.s32.totalorder %s20, 3
      %p185 = por %p183, %p184
      %p186 = scmp.ne.s32.totalorder %s177, %s178
      %p187 = scmp.eq.s32.totalorder %s20, 0
      %p188 = por %p186, %p187
      %p189 = scmp.ne.s32.totalorder %s177, %s178
      %p190 = scmp.eq.s32.totalorder %s21, 3
      %p191 = por %p189, %p190
      %p193 = scmp.ne.s32.totalorder %s178, %s192
      %p194 = scmp.eq.s32.totalorder %s21, 0
      %p195 = por %p193, %p194
      %s197 = sadd.s32 %s196, 1
      %p200 = scmp.eq.s32.totalorder %s15, 3
      %p201 = scmp.ne.s32.totalorder %s196, %s198
      %p202 = scmp.eq.s32.totalorder %s15, 0
      %p203 = por %p201, %p202
      %p204 = scmp.ne.s32.totalorder %s196, %s198
      %p205 = scmp.eq.s32.totalorder %s20, 3
      %p206 = por %p204, %p205
      %p207 = scmp.ne.s32.totalorder %s198, %s199
      %p208 = scmp.eq.s32.totalorder %s20, 0
      %p209 = por %p207, %p208
      %p210 = scmp.ne.s32.totalorder %s198, %s199
      %p211 = scmp.eq.s32.totalorder %s21, 3
      %p212 = por %p210, %p211
      %p214 = scmp.ne.s32.totalorder %s199, %s213
      %p215 = scmp.eq.s32.totalorder %s21, 0
      %p216 = por %p214, %p215
      %s217 = ssub.s32 %s15, %s22
      %p218 = scmp.eq.s32.totalorder %s217, 0
      %s220 = sadd.s32 %s219, 1
      %s221 = scalar_select %p218, %s219, %s220
      %p224 = pneg %p218
      %p225 = scmp.eq.s32.totalorder %s15, 3
      %p226 = por %p224, %p225
      %p227 = scmp.ne.s32.totalorder %s219, %s222
      %p228 = scmp.eq.s32.totalorder %s15, 0
      %p229 = por %p227, %p228
      %p230 = scmp.ne.s32.totalorder %s219, %s222
      %p231 = scmp.eq.s32.totalorder %s20, 3
      %p232 = por %p230, %p231
      %p233 = scmp.ne.s32.totalorder %s222, %s223
      %p234 = scmp.eq.s32.totalorder %s20, 0
      %p235 = por %p233, %p234
      %p236 = scmp.ne.s32.totalorder %s222, %s223
      %p237 = scmp.eq.s32.totalorder %s21, 3
      %p238 = por %p236, %p237
      %p240 = scmp.ne.s32.totalorder %s223, %s239
      %p241 = scmp.eq.s32.totalorder %s21, 0
      %p242 = por %p240, %p241
      %p243 = scmp.le.s32.totalorder 1, %s15
      %p244 = scmp.lt.s32.totalorder %s15, 5
      %p245 = pnand %p243, %p244
      %p246 = pneg %p245
      // Predicated region
      $region9: #{mlp_forward.1} parent=5 // pred_check
        _
      $region10: #{mlp_forward.1} parent=5 // pred_check_branch
        %248 = sbr.rel (%p245) target = $region12
      $region11: #{mlp_forward.1} parent=5 // pred_region
        %s249 = ssub.s32 %s15, 1
        // Predicated region
        $region13: #{mlp_forward.1} parent=11 // pred_check
          %p250 = pneg %p62
        $region14: #{mlp_forward.1} parent=11 // pred_check_branch
          %252 = sbr.rel (%p250) target = $region16
        $region15: #{mlp_forward.1} parent=11 // pred_region
          _
        $region16: #{mlp_forward.1} parent=11 // pred_fallthru
          _
        // Predicated region
        $region17: #{mlp_forward.1} parent=11 // pred_check
          %p253 = pneg %p83
        $region18: #{mlp_forward.1} parent=11 // pred_check_branch
          %255 = sbr.rel (%p253) target = $region20
        $region19: #{mlp_forward.1} parent=11 // pred_region
          _
        $region20: #{mlp_forward.1} parent=11 // pred_fallthru
          _
        // Predicated region
        $region21: #{mlp_forward.1} parent=11 // pred_check
          %p256 = pneg %p104
        $region22: #{mlp_forward.1} parent=11 // pred_check_branch
          %258 = sbr.rel (%p256) target = $region24
        $region23: #{mlp_forward.1} parent=11 // pred_region
          _
        $region24: #{mlp_forward.1} parent=11 // pred_fallthru
          _
        // Predicated region
        $region25: #{mlp_forward.1} parent=11 // pred_check
          %p259 = pneg %p125
        $region26: #{mlp_forward.1} parent=11 // pred_check_branch
          %261 = sbr.rel (%p259) target = $region28
        $region27: #{mlp_forward.1} parent=11 // pred_region
          _
        $region28: #{mlp_forward.1} parent=11 // pred_fallthru
          _
        // Predicated region
        $region29: #{mlp_forward.1} parent=11 // pred_check
          %p262 = pneg %p146
        $region30: #{mlp_forward.1} parent=11 // pred_check_branch
          %264 = sbr.rel (%p262) target = $region32
        $region31: #{mlp_forward.1} parent=11 // pred_region
          _
        $region32: #{mlp_forward.1} parent=11 // pred_fallthru
          _
        // Predicated region
        $region33: #{mlp_forward.1} parent=11 // pred_check
          %p265 = pneg %p167
        $region34: #{mlp_forward.1} parent=11 // pred_check_branch
          %267 = sbr.rel (%p265) target = $region36
        $region35: #{mlp_forward.1} parent=11 // pred_region
          _
        $region36: #{mlp_forward.1} parent=11 // pred_fallthru
          _
        // Predicated region
        $region37: #{mlp_forward.1} parent=11 // pred_check
          %p268 = pneg %p188
        $region38: #{mlp_forward.1} parent=11 // pred_check_branch
          %270 = sbr.rel (%p268) target = $region40
        $region39: #{mlp_forward.1} parent=11 // pred_region
          _
        $region40: #{mlp_forward.1} parent=11 // pred_fallthru
          _
        // Predicated region
        $region41: #{mlp_forward.1} parent=11 // pred_check
          %p271 = pneg %p209
        $region42: #{mlp_forward.1} parent=11 // pred_check_branch
          %273 = sbr.rel (%p271) target = $region44
        $region43: #{mlp_forward.1} parent=11 // pred_region
          _
        $region44: #{mlp_forward.1} parent=11 // pred_fallthru
          _
      $region12: #{mlp_forward.1} parent=5 // pred_fallthru
        _
      %p274 = scmp.lt.s32.totalorder %s15, 4
      // Predicated region
      $region45: #{mlp_forward.1} parent=5 // pred_check
        %p275 = pneg %p274
      $region46: #{mlp_forward.1} parent=5 // pred_check_branch
        %277 = sbr.rel (%p275) target = $region48
      $region47: #{mlp_forward.1} parent=5 // pred_region
        // Predicated region
        $region49: #{mlp_forward.1} parent=47 // pred_check
          %p278 = pneg %p35
        $region50: #{mlp_forward.1} parent=47 // pred_check_branch
          %280 = sbr.rel (%p278) target = $region52
        $region51: #{mlp_forward.1} parent=47 // pred_region
          %s281 = sand.u32 %s25, 1
          %s282 = sand.u32 %s25, 1
          %s283 = smul.addr %s282, 16
          %s284 = scalar_lea.vmem [#allocation2], %s283
          %s285 = smul.u32 2, %s15
          %s286 = smul.addr %s285, 4
          %s287 = scalar_lea.vmem %s0, %s286
          // Predicated region
          $region53: #{mlp_forward.1} parent=51 // pred_check
            _
          $region54: #{mlp_forward.1} parent=51 // pred_check_branch
            %289 = sbr.rel (0) target = $region56
          $region55: #{mlp_forward.1} parent=51 // pred_region
            // Predicated region
            $region57: #{mlp_forward.1} parent=55 // pred_check
              _
            $region58: #{mlp_forward.1} parent=55 // pred_check_branch
              %291 = sbr.rel (0) target = $region60
            $region59: #{mlp_forward.1} parent=55 // pred_region
              // Predicated region
              $region72: #{mlp_forward.1} parent=59 // pred_check
                _
              $region73: #{mlp_forward.1} parent=59 // pred_check_branch
                %309 = sbr.rel (0) target = $region75
              $region74: #{mlp_forward.1} parent=59 // pred_region
                loop: start=0, step=1, limit=1
                $region76: #{mlp_forward.1} parent=74 // loop_pre_header
                  _
                $region77: #{mlp_forward.1} parent=74 // loop_header
                  %s311 = sphi 0, %s315
                  %p312 = scmp.ge.s32.totalorder %s311, 1
                  %s316 = sphi %s287, %s287
                  %s317 = sphi %s284, %s284
                $region78: #{mlp_forward.1} parent=74 // loop_header_branch
                  %314 = sbr.rel (%p312) target = $region82
                $region79: #{mlp_forward.1} parent=74 // loop_body
                  %v318 = vld [vmem:[%s316] sm:$0xff]
                  %319 = vst [vmem:[%s317] sm:$0xff] %v318
                  %v320 = vld [vmem:[%s316 + $0x20] sm:$0xff]
                  %321 = vst [vmem:[%s317 + $0x8] sm:$0xff] %v320
                $region80: #{mlp_forward.1} parent=74 // loop_footer
                  %s315 = sadd.s32 1, %s311
                $region81: #{mlp_forward.1} parent=74 // loop_footer_branch
                  %310 = sbr.rel target = $region77
                $region82: #{mlp_forward.1} parent=74 // loop_exit
                  _
              $region75: #{mlp_forward.1} parent=59 // pred_fallthru
                _
              // Predicated region
              $region83: #{mlp_forward.1} parent=59 // pred_check
                _
              $region84: #{mlp_forward.1} parent=59 // pred_check_branch
                %323 = sbr.rel target = $region86
              $region85: #{mlp_forward.1} parent=59 // pred_region
                _
              $region86: #{mlp_forward.1} parent=59 // pred_fallthru
                _
            $region60: #{mlp_forward.1} parent=55 // pred_fallthru
              _
            // Predicated region
            $region61: #{mlp_forward.1} parent=55 // pred_check
              _
            $region62: #{mlp_forward.1} parent=55 // pred_check_branch
              %293 = sbr.rel target = $region64
            $region63: #{mlp_forward.1} parent=55 // pred_region
              %s295 = ssub.s32 256, 1
              loop: start=0, step=1, limit=1
              $region65: #{mlp_forward.1} parent=63 // loop_pre_header
                _
              $region66: #{mlp_forward.1} parent=63 // loop_header
                %s297 = sphi 0, %s301
                %p298 = scmp.ge.s32.totalorder %s297, 1
                %s302 = sphi %s287, %s287
                %s303 = sphi %s284, %s284
              $region67: #{mlp_forward.1} parent=63 // loop_header_branch
                %300 = sbr.rel (%p298) target = $region71
              $region68: #{mlp_forward.1} parent=63 // loop_body
                %v304 = vld [vmem:[%s302] sm:%s295]
                %305 = vst [vmem:[%s303] sm:%s295] %v304
                %v306 = vld [vmem:[%s302 + $0x20] sm:%s295]
                %307 = vst [vmem:[%s303 + $0x8] sm:%s295] %v306
              $region69: #{mlp_forward.1} parent=63 // loop_footer
                %s301 = sadd.s32 1, %s297
              $region70: #{mlp_forward.1} parent=63 // loop_footer_branch
                %296 = sbr.rel target = $region66
              $region71: #{mlp_forward.1} parent=63 // loop_exit
                _
            $region64: #{mlp_forward.1} parent=55 // pred_fallthru
              _
          $region56: #{mlp_forward.1} parent=51 // pred_fallthru
            _
          %324 = vnop
        $region52: #{mlp_forward.1} parent=47 // pred_fallthru
          _
      $region48: #{mlp_forward.1} parent=5 // pred_fallthru
        _
      %p325 = scmp.le.s32.totalorder 1, %s15
      %p326 = scmp.lt.s32.totalorder %s15, 5
      %p327 = pnand %p325, %p326
      %p328 = pneg %p327
      // Predicated region
      $region87: #{mlp_forward.1} parent=5 // pred_check
        _
      $region88: #{mlp_forward.1} parent=5 // pred_check_branch
        %330 = sbr.rel (%p327) target = $region90
      $region89: #{mlp_forward.1} parent=5 // pred_region
        %s331 = ssub.s32 %s15, 1
        %s332 = sand.u32 %s28, 1
        %s333 = sand.u32 %s28, 1
        %s334 = smul.addr %s333, 16
        %s335 = scalar_lea.vmem [#allocation2], %s334
        // Predicated region
        $region91: #{mlp_forward.1} parent=89 // pred_check
          %p336 = pneg %p41
        $region92: #{mlp_forward.1} parent=89 // pred_check_branch
          %338 = sbr.rel (%p336) target = $region94
        $region93: #{mlp_forward.1} parent=89 // pred_region
          _
        $region94: #{mlp_forward.1} parent=89 // pred_fallthru
          _
        %s339 = sand.u32 %s28, 1
        %s340 = sand.u32 %s28, 1
        %s341 = smul.addr %s340, 16
        %s342 = scalar_lea.vmem [#allocation2], %s341
        %p343 = pneg %p41
        %p344 = pneg %p38
        %p345 = pneg %p62
        %p346 = pneg %p59
        %p347 = pneg %p83
        %p348 = pneg %p80
        %p349 = pneg %p104
        %p350 = pneg %p101
        %p351 = pneg %p125
        %p352 = pneg %p122
        %p353 = pneg %p146
        %p354 = pneg %p143
        %p355 = pneg %p167
        %p356 = pneg %p164
        %p357 = pneg %p188
        %p358 = pneg %p185
        %p359 = pneg %p209
        %p360 = pneg %p206
        %p361 = pneg %p235
        %p362 = pneg %p232
        %s363 = smul.u32 2, %s20
        %p364 = scmp.lt.s32.totalorder %s363, 7
        %s365 = scalar_select %p364, %s363, 7
        %s366 = smul.addr %s365, 4
        %s367 = scalar_lea.vmem %s9, %s366
        %s368 = smul.u32 2, %s20
        %s369 = smul.u32 2, %s20
        %p370 = scmp.lt.s32.totalorder %s369, 7
        %s371 = scalar_select %p370, %s369, 7
        %s372 = smul.addr %s371, 4
        %s373 = scalar_lea.vmem %s9, %s372
        %s374 = smul.u32 2, %s20
        %v376 = vld [vmem:[%s1] sm:$0xf]
        %v377 = vld [vmem:[%s335] sm:$0xff]
        %v378 = vld [vmem:[%s335 + $0x8] sm:$0xff]
        %v379 = vld [vmem:[%s2] sm:$0xff]
        %381 = vset.pattern.permute.xlu0 0
        %382 = vperm.xlu0 %381, %v379
        %v383 = vpop.permute.xlu0 %382
        %v387 = vunpack.c.l.b16 %v377
        %v388 = vunpack.c.h.b16 %v377
        %v389 = vunpack.c.l.b16 %v378
        %v390 = vunpack.c.h.b16 %v378
        %v391 = vpack.c.b16 %v389, %v387
        %v392 = vpack.c.b16 %v390, %v388
        %vm395 = vcmask 130048
        %v397 = vsel %vm395, %v376, 0
        %399 = vmatpush.bf16.msra.mxu0 0
        %400 = vmatpush.bf16.msra.mxu0 0
        %401 = vmatpush.bf16.msra.mxu0 0
        %402 = vmatpush.bf16.msra.mxu0 0
        %403 = vmatpush.bf16.msra.mxu0 0
        %404 = vmatpush.bf16.msra.mxu0 0
        %405 = vmatpush.bf16.msra.mxu0 0
        %406 = vmatpush.bf16.msra.mxu0 %v391
        %407 = vmatmul.bf16.gmra.mxu0 %v397
        %v408 = vpop.f32.mrf.mxu0
        %v409 = vadd.f32 %v383, %v408
        %v410 = vpop.f32.mrf.mxu0
        %411 = vdwg.mxu0
        %412 = vmatpush.bf16.msra.mxu0 0
        %413 = vmatpush.bf16.msra.mxu0 0
        %414 = vmatpush.bf16.msra.mxu0 0
        %415 = vmatpush.bf16.msra.mxu0 0
        %416 = vmatpush.bf16.msra.mxu0 0
        %417 = vmatpush.bf16.msra.mxu0 0
        %418 = vmatpush.bf16.msra.mxu0 0
        %419 = vmatpush.bf16.msra.mxu0 %v392
        %420 = vmatmul.bf16.gmra.mxu0 %v397
        %v421 = vpop.f32.mrf.mxu0
        %v422 = vadd.f32 %v383, %v421
        %v423 = vpop.f32.mrf.mxu0
        %424 = vdwg.mxu0
        %v425 = vmax.f32 %v409, 0.0
        %v426 = vmax.f32 %v422, 0.0
        %v427 = vld [vmem:[%s3] sm:$0xf]
        %v428 = vld [vmem:[%s3 + $0x4] sm:$0xf]
        %v429 = vpack.c.bf16 %v425, %v425
        %v430 = vpack.c.bf16 %v426, %v426
        %v431 = vld [vmem:[%s4] sm:$0xff]
        %v432 = vld [vmem:[%s4 + $0x8] sm:$0xff]
        %434 = vset.pattern.permute.xlu0 0
        %435 = vperm.xlu0 %434, %v431
        %v436 = vpop.permute.xlu0 %435
        %439 = vset.pattern.permute.xlu0 0
        %440 = vperm.xlu0 %439, %v432
        %v441 = vpop.permute.xlu0 %440
        %v445 = vunpack.c.l.b16 %v427
        %v446 = vunpack.c.l.b16 %v428
        %v447 = vpack.c.b16 %v446, %v445
        %vm448 = vcmask 64512
        %v450 = vsel %vm448, %v447, 0
        %vm452 = vcmask 1043456
        %v454 = vsel %vm452, %v429, 0
        %v457 = vsel %vm452, %v430, 0
        %459 = vmatpush.bf16.msra.mxu0 0
        %460 = vmatpush.bf16.msra.mxu0 0
        %461 = vmatpush.bf16.msra.mxu0 0
        %462 = vmatpush.bf16.msra.mxu0 0
        %463 = vmatpush.bf16.msra.mxu0 0
        %464 = vmatpush.bf16.msra.mxu0 0
        %465 = vmatpush.bf16.msra.mxu0 0
        %466 = vmatpush.bf16.msra.mxu0 %v454
        %467 = vmatmul.bf16.gmra.mxu0 %v450
        %v468 = vpop.f32.mrf.mxu0
        %v469 = vadd.f32 %v436, %v468
        %v470 = vpop.f32.mrf.mxu0
        %v471 = vadd.f32 %v441, %v470
        %472 = vdwg.mxu0
        %473 = vmatpush.bf16.msra.mxu0 0
        %474 = vmatpush.bf16.msra.mxu0 0
        %475 = vmatpush.bf16.msra.mxu0 0
        %476 = vmatpush.bf16.msra.mxu0 0
        %477 = vmatpush.bf16.msra.mxu0 0
        %478 = vmatpush.bf16.msra.mxu0 0
        %479 = vmatpush.bf16.msra.mxu0 0
        %480 = vmatpush.bf16.msra.mxu0 %v457
        %481 = vmatmul.bf16.gmra.mxu0 %v450
        %v482 = vpop.f32.mrf.mxu0
        %v483 = vadd.f32 %v436, %v482
        %v484 = vpop.f32.mrf.mxu0
        %v485 = vadd.f32 %v441, %v484
        %486 = vdwg.mxu0
        %v487 = vmax.f32 %v469, 0.0
        %v488 = vmax.f32 %v483, 0.0
        %v489 = vmax.f32 %v471, 0.0
        %v490 = vmax.f32 %v485, 0.0
        %v491 = vld [vmem:[%s5] sm:$0xf]
        %v492 = vld [vmem:[%s5 + $0x4] sm:$0xf]
        %v493 = vld [vmem:[%s5 + $0x8] sm:$0xf]
        %v494 = vld [vmem:[%s5 + $0xc] sm:$0xf]
        %v495 = vpack.c.bf16 %v489, %v487
        %v496 = vpack.c.bf16 %v490, %v488
        %v497 = vld [vmem:[%s6] sm:$0xff]
        %v498 = vld [vmem:[%s6 + $0x8] sm:$0xff]
        %v499 = vld [vmem:[%s6 + $0x10] sm:$0xff]
        %v500 = vld [vmem:[%s6 + $0x18] sm:$0xff]
        %502 = vset.pattern.permute.xlu0 0
        %503 = vperm.xlu0 %502, %v497
        %v504 = vpop.permute.xlu0 %503
        %507 = vset.pattern.permute.xlu0 0
        %508 = vperm.xlu0 %507, %v498
        %v509 = vpop.permute.xlu0 %508
        %512 = vset.pattern.permute.xlu0 0
        %513 = vperm.xlu0 %512, %v499
        %v514 = vpop.permute.xlu0 %513
        %517 = vset.pattern.permute.xlu0 0
        %518 = vperm.xlu0 %517, %v500
        %v519 = vpop.permute.xlu0 %518
        %v525 = vunpack.c.l.b16 %v491
        %v526 = vunpack.c.l.b16 %v492
        %v527 = vunpack.c.l.b16 %v493
        %v528 = vunpack.c.l.b16 %v494
        %v529 = vpack.c.b16 %v526, %v525
        %v530 = vpack.c.b16 %v528, %v527
        %v532 = vsel %vm395, %v529, 0
        %v535 = vsel %vm395, %v530, 0
        %537 = vmatpush.bf16.msra.mxu0 0
        %538 = vmatpush.bf16.msra.mxu0 0
        %539 = vmatpush.bf16.msra.mxu0 0
        %540 = vmatpush.bf16.msra.mxu0 0
        %541 = vmatpush.bf16.msra.mxu0 0
        %542 = vmatpush.bf16.msra.mxu0 0
        %543 = vmatpush.bf16.msra.mxu0 0
        %544 = vmatpush.bf16.msra.mxu0 %v495
        %545 = vmatmul.bf16.gmra.mxu0 %v532
        %v546 = vpop.f32.mrf.mxu0
        %v547 = vadd.f32 %v504, %v546
        %v548 = vpop.f32.mrf.mxu0
        %v549 = vadd.f32 %v509, %v548
        %550 = vmatmul.bf16.gmra.mxu0 %v535
        %v551 = vpop.f32.mrf.mxu0
        %v552 = vadd.f32 %v514, %v551
        %v553 = vpop.f32.mrf.mxu0
        %v554 = vadd.f32 %v519, %v553
        %555 = vdwg.mxu0
        %556 = vmatpush.bf16.msra.mxu0 0
        %557 = vmatpush.bf16.msra.mxu0 0
        %558 = vmatpush.bf16.msra.mxu0 0
        %559 = vmatpush.bf16.msra.mxu0 0
        %560 = vmatpush.bf16.msra.mxu0 0
        %561 = vmatpush.bf16.msra.mxu0 0
        %562 = vmatpush.bf16.msra.mxu0 0
        %563 = vmatpush.bf16.msra.mxu0 %v496
        %564 = vmatmul.bf16.gmra.mxu0 %v532
        %v565 = vpop.f32.mrf.mxu0
        %v566 = vadd.f32 %v504, %v565
        %v567 = vpop.f32.mrf.mxu0
        %v568 = vadd.f32 %v509, %v567
        %569 = vmatmul.bf16.gmra.mxu0 %v535
        %v570 = vpop.f32.mrf.mxu0
        %v571 = vadd.f32 %v514, %v570
        %v572 = vpop.f32.mrf.mxu0
        %v573 = vadd.f32 %v519, %v572
        %574 = vdwg.mxu0
        %v575 = vmax.f32 %v547, 0.0
        %v576 = vmax.f32 %v566, 0.0
        %v577 = vmax.f32 %v549, 0.0
        %v578 = vmax.f32 %v568, 0.0
        %v579 = vmax.f32 %v552, 0.0
        %v580 = vmax.f32 %v571, 0.0
        %v581 = vmax.f32 %v554, 0.0
        %v582 = vmax.f32 %v573, 0.0
        %v583 = vld [vmem:[%s7] sm:$0x3]
        %v584 = vpack.c.bf16 %v577, %v575
        %v585 = vpack.c.bf16 %v578, %v576
        %v586 = vpack.c.bf16 %v581, %v579
        %v587 = vpack.c.bf16 %v582, %v580
        %v588 = vld [vmem:[%s8] sm:$0xf]
        %590 = vset.pattern.permute.xlu0 0
        %591 = vperm.xlu0 %590, %v588
        %v592 = vpop.permute.xlu0 %591
        %vm594 = vcmask 261120
        %v596 = vsel %vm594, %v583, 0
        %598 = vmatpush.bf16.msra.mxu0 0
        %599 = vmatpush.bf16.msra.mxu0 0
        %600 = vmatpush.bf16.msra.mxu0 0
        %601 = vmatpush.bf16.msra.mxu0 0
        %602 = vmatpush.bf16.msra.mxu0 0
        %603 = vmatpush.bf16.msra.mxu0 0
        %604 = vmatpush.bf16.msra.mxu0 %v586
        %605 = vmatpush.bf16.msra.mxu0 %v584
        %606 = vmatmul.bf16.gmra.mxu0 %v596
        %v607 = vpop.f32.mrf.mxu0
        %v608 = vadd.f32 %v592, %v607
        %v609 = vpop.f32.mrf.mxu0
        %610 = vdwg.mxu0
        %611 = vmatpush.bf16.msra.mxu0 0
        %612 = vmatpush.bf16.msra.mxu0 0
        %613 = vmatpush.bf16.msra.mxu0 0
        %614 = vmatpush.bf16.msra.mxu0 0
        %615 = vmatpush.bf16.msra.mxu0 0
        %616 = vmatpush.bf16.msra.mxu0 0
        %617 = vmatpush.bf16.msra.mxu0 %v587
        %618 = vmatpush.bf16.msra.mxu0 %v585
        %619 = vmatmul.bf16.gmra.mxu0 %v596
        %v620 = vpop.f32.mrf.mxu0
        %v621 = vadd.f32 %v592, %v620
        %v622 = vpop.f32.mrf.mxu0
        %623 = vdwg.mxu0
        %v626 = vrot.slane %v621, 4
        %v627 = vsel %vm452, %v608, %v626
        %629 = vst [vmem:[%s373] sm:$0xff] %v627
        %s630 = smul.u32 2, %s20
        %p631 = scmp.lt.s32.totalorder %s630, 7
        %s632 = scalar_select %p631, %s630, 7
        %s633 = smul.addr %s632, 4
        %s634 = scalar_lea.vmem %s9, %s633
        // Predicated region
        $region95: #{mlp_forward.1} parent=89 // pred_check
          %p635 = pneg %p232
        $region96: #{mlp_forward.1} parent=89 // pred_check_branch
          %637 = sbr.rel (%p635) target = $region98
        $region97: #{mlp_forward.1} parent=89 // pred_region
          %s638 = smul.u32 2, %s20
        $region98: #{mlp_forward.1} parent=89 // pred_fallthru
          _
      $region90: #{mlp_forward.1} parent=5 // pred_fallthru
        _
      %p639 = scmp.le.s32.totalorder 2, %s15
      // Predicated region
      $region99: #{mlp_forward.1} parent=5 // pred_check
        %p640 = pneg %p639
      $region100: #{mlp_forward.1} parent=5 // pred_check_branch
        %642 = sbr.rel (%p640) target = $region102
      $region101: #{mlp_forward.1} parent=5 // pred_region
        %s643 = ssub.s32 %s15, 2
        // Predicated region
        $region103: #{mlp_forward.1} parent=101 // pred_check
          %p644 = pneg %p238
        $region104: #{mlp_forward.1} parent=101 // pred_check_branch
          %646 = sbr.rel (%p644) target = $region106
        $region105: #{mlp_forward.1} parent=101 // pred_region
          %s647 = smul.u32 2, %s21
          %p648 = scmp.lt.s32.totalorder %s647, 7
          %s649 = scalar_select %p648, %s647, 7
          %s650 = smul.addr %s649, 4
          %s651 = scalar_lea.vmem %s9, %s650
        $region106: #{mlp_forward.1} parent=101 // pred_fallthru
          _
      $region102: #{mlp_forward.1} parent=5 // pred_fallthru
        _
    $region6: #{mlp_forward.1} parent=1 // loop_footer
      %s19 = sadd.s32 1, %s15
    $region7: #{mlp_forward.1} parent=1 // loop_footer_branch
      %14 = sbr.rel target = $region3
    $region8: #{mlp_forward.1} parent=1 // loop_exit
      _

</llo_original>
